<compile_context>
chip_gen: v6e
topology: v6e:2x2x1
jax: 0.10.0
libtpu: 0.0.40
codegen_flags: <defaults>
</compile_context>

<pallas_src>
import math
import jax
import jax.numpy as jnp
from jax.experimental import pallas as pl
from jax.experimental.pallas import tpu as pltpu  # noqa: F401  (TPU backend)

# Small, module-consistent shapes.
B, S, E = 2, 8, 32          # batch, seq, emb_size
H = 4                       # num_heads
DH = E // H                 # head dim
I = 64                      # intermediate_size
LN_EPS = 1e-5               # nn.LayerNorm default eps


# ------------------------------------------------------------------ kernel --

def _encoder_kernel(x_ref, mask_ref, wqk_ref, bqk_ref, w1_ref, b1_ref,
                    w2_ref, b2_ref, g_ref, beta_ref, probs_ref, out_ref):
    x = x_ref[...]                               # (B, S, E)
    x2d = x.reshape(B * S, E)                    # collapse leading dims (lane dim unchanged)

    # ---------------- attention probabilities (fused Q/K projection) --------
    qk = jnp.dot(x2d, wqk_ref[...], preferred_element_type=jnp.float32) + bqk_ref[...]
    qk3 = qk.reshape(B, S, 2 * E)                # (B, S, 2E)
    qpart = qk3[:, :, :E] * (1.0 / math.sqrt(DH))   # scale hoisted out of the head loop
    kpart = qk3[:, :, E:]

    # additive mask, broadcast once (hoisted out of the head loop)
    mask_bc = jnp.broadcast_to(mask_ref[...][:, None, :], (B, S, S))

    for h in range(H):                           # static, unrolled (H = 4)
        qh = qpart[:, :, h * DH:(h + 1) * DH]    # (B, S, DH)
        kh = kpart[:, :, h * DH:(h + 1) * DH]    # (B, S, DH)
        sc = jnp.einsum('bsd,btd->bst', qh, kh,
                        preferred_element_type=jnp.float32) + mask_bc
        m = jnp.max(sc, axis=-1, keepdims=True)
        e = jnp.exp(sc - m)
        denom = jnp.sum(e, axis=-1, keepdims=True)
        probs_ref[h] = e * pl.reciprocal(denom, approx=False)   # softmax(dim=-1)

    # ---------------- FFN -> residual add -> LayerNorm ----------------------
    hdn = jnp.maximum(
        jnp.dot(x2d, w1_ref[...], preferred_element_type=jnp.float32) + b1_ref[...],
        0.0)                                      # ReLU
    ffn = jnp.dot(hdn, w2_ref[...], preferred_element_type=jnp.float32) + b2_ref[...]
    y = x2d + ffn                                 # dropout == identity (eval)
    mu = jnp.mean(y, axis=-1, keepdims=True)
    var = jnp.mean((y - mu) ** 2, axis=-1, keepdims=True)
    out2d = (y - mu) * jax.lax.rsqrt(var + LN_EPS) * g_ref[...] + beta_ref[...]
    out_ref[...] = out2d.reshape(B, S, E)


# ------------------------------------------------------------------ wrapper --

@jax.jit
def encoder_layer(x, mask, p):
    # Fuse Q/K weights (one projection matmul with N = 2E) and flatten the mask
    # to rows; both are trivial XLA layout ops outside the kernel.
    wqk = jnp.concatenate([p["wq"], p["wk"]], axis=1)     # (E, 2E)
    bqk = jnp.concatenate([p["bq"], p["bk"]], axis=1)     # (1, 2E)
    mask2 = mask.reshape(B, S)                            # (B, S) additive mask rows

    probs_hb, out = pl.pallas_call(
        _encoder_kernel,
        out_shape=(jax.ShapeDtypeStruct((H, B, S, S), jnp.float32),
                   jax.ShapeDtypeStruct((B, S, E), jnp.float32)),
        # no grid / no BlockSpecs: single invocation, whole arrays in VMEM
    )(x, mask2, wqk, bqk, p["w1"], p["b1"], p["w2"], p["b2"],
      p["gamma"], p["beta"])

    probs = jnp.transpose(probs_hb, (1, 0, 2, 3))          # (B, H, S, S)
    return out, probs


def _ref_forward(x, mask, p):
    """Pure-JAX reference mirroring the PyTorch forward (eval mode)."""
    q = x @ p["wq"] + p["bq"]
    k = x @ p["wk"] + p["bk"]
    q = q.reshape(B, S, H, DH).transpose(0, 2, 1, 3)
    k = k.reshape(B, S, H, DH).transpose(0, 2, 1, 3)
    scores = jnp.einsum("bhsd,bhtd->bhst", q, k) / math.sqrt(DH) + mask
    probs = jax.nn.softmax(scores, axis=-1)
    hdn = jax.nn.relu(x @ p["w1"] + p["b1"])
    ffn = hdn @ p["w2"] + p["b2"]
    y = x + ffn
    mu = y.mean(-1, keepdims=True)
    var = ((y - mu) ** 2).mean(-1, keepdims=True)
    out = (y - mu) / jnp.sqrt(var + LN_EPS) * p["gamma"] + p["beta"]
    return out, probs


# --------------------------------------------------------------------- main --

if __name__ == "__main__":
    ks = jax.random.split(jax.random.PRNGKey(0), 10)

    # Deterministic synthetic parameters (weights stored as [in, out]).
    params = {
        "wq": 0.05 * jax.random.normal(ks[0], (E, E), jnp.float32),
        "bq": 0.05 * jax.random.normal(ks[1], (1, E), jnp.float32),
        "wk": 0.05 * jax.random.normal(ks[2], (E, E), jnp.float32),
        "bk": 0.05 * jax.random.normal(ks[3], (1, E), jnp.float32),
        "w1": 0.05 * jax.random.normal(ks[4], (E, I), jnp.float32),
        "b1": 0.05 * jax.random.normal(ks[5], (1, I), jnp.float32),
        "w2": 0.05 * jax.random.normal(ks[6], (I, E), jnp.float32),
        "b2": 0.05 * jax.random.normal(ks[7], (1, E), jnp.float32),
        "gamma": jnp.ones((1, E), jnp.float32),   # nn.LayerNorm default weight
        "beta": jnp.zeros((1, E), jnp.float32),   # nn.LayerNorm default bias
    }

    x = jax.random.normal(ks[8], (B, S, E), jnp.float32)
    # Additive attention mask: 0 = visible, -1e4 = masked (last 2 keys of batch 1).
    keep = jnp.ones((B, S), jnp.float32).at[1, -2:].set(0.0)
    mask = ((1.0 - keep) * -10000.0).reshape(B, 1, 1, S)

    out, probs = encoder_layer(x, mask, params)
    jax.block_until_ready((out, probs))

    ref_out, ref_probs = _ref_forward(x, mask, params)
    assert jnp.allclose(out, ref_out, atol=1e-4), "output mismatch vs reference"
    assert jnp.allclose(probs, ref_probs, atol=1e-4), "attn probs mismatch vs reference"

    print("KERNEL_OK")
</pallas_src>

<mosaic_0001>
module attributes {stable_mosaic.version = 11 : i64} {
  func.func @_encoder_kernel(%arg0: memref<2x8x32xf32, #tpu.memory_space<vmem>>, %arg1: memref<2x8xf32, #tpu.memory_space<vmem>>, %arg2: memref<32x64xf32, #tpu.memory_space<vmem>>, %arg3: memref<1x64xf32, #tpu.memory_space<vmem>>, %arg4: memref<32x64xf32, #tpu.memory_space<vmem>>, %arg5: memref<1x64xf32, #tpu.memory_space<vmem>>, %arg6: memref<64x32xf32, #tpu.memory_space<vmem>>, %arg7: memref<1x32xf32, #tpu.memory_space<vmem>>, %arg8: memref<1x32xf32, #tpu.memory_space<vmem>>, %arg9: memref<1x32xf32, #tpu.memory_space<vmem>>, %arg10: memref<4x2x8x8xf32, #tpu.memory_space<vmem>>, %arg11: memref<2x8x32xf32, #tpu.memory_space<vmem>>) attributes {dimension_semantics = [], scalar_prefetch = 0 : i64, scratch_operands = 0 : i64, tpu.core_type = #tpu.core_type<tc>} {
    %c0 = arith.constant 0 : index
    %c0_0 = arith.constant 0 : index
    %c0_1 = arith.constant 0 : index
    %0 = vector.load %arg0[%c0, %c0_0, %c0_1] : memref<2x8x32xf32, #tpu.memory_space<vmem>>, vector<2x8x32xf32>
    %1 = vector.shape_cast %0 : vector<2x8x32xf32> to vector<16x32xf32>
    %c0_2 = arith.constant 0 : index
    %c0_3 = arith.constant 0 : index
    %2 = vector.load %arg2[%c0_2, %c0_3] : memref<32x64xf32, #tpu.memory_space<vmem>>, vector<32x64xf32>
    %cst = arith.constant dense<0.000000e+00> : vector<16x64xf32>
    %3 = tpu.matmul %1, %2, %cst {dimension_numbers = #tpu.dot_dimension_numbers<[1], [0], [0], [1], [0, 0, 1, 1], [], []>} : vector<16x32xf32>, vector<32x64xf32>, vector<16x64xf32> -> vector<16x64xf32>
    %c0_4 = arith.constant 0 : index
    %c0_5 = arith.constant 0 : index
    %4 = vector.load %arg3[%c0_4, %c0_5] : memref<1x64xf32, #tpu.memory_space<vmem>>, vector<1x64xf32>
    %5 = vector.broadcast %4 : vector<1x64xf32> to vector<16x64xf32>
    %6 = arith.addf %3, %5 : vector<16x64xf32>
    %7 = vector.shape_cast %6 : vector<16x64xf32> to vector<2x8x64xf32>
    %8 = vector.extract_strided_slice %7 {offsets = [0, 0, 0], sizes = [2, 8, 32], strides = [1, 1, 1]} : vector<2x8x64xf32> to vector<2x8x32xf32>
    %cst_6 = arith.constant 0.353553385 : f32
    %9 = vector.broadcast %cst_6 : f32 to vector<2x8x32xf32>
    %10 = arith.mulf %8, %9 : vector<2x8x32xf32>
    %11 = vector.extract_strided_slice %7 {offsets = [0, 0, 32], sizes = [2, 8, 32], strides = [1, 1, 1]} : vector<2x8x64xf32> to vector<2x8x32xf32>
    %c0_7 = arith.constant 0 : index
    %c0_8 = arith.constant 0 : index
    %12 = vector.load %arg1[%c0_7, %c0_8] : memref<2x8xf32, #tpu.memory_space<vmem>>, vector<2x8xf32>
    %13 = vector.shape_cast %12 : vector<2x8xf32> to vector<2x1x8xf32>
    %14 = vector.shape_cast %13 : vector<2x1x8xf32> to vector<2x1x8xf32>
    %15 = vector.broadcast %14 : vector<2x1x8xf32> to vector<2x8x8xf32>
    %16 = vector.extract_strided_slice %10 {offsets = [0, 0, 0], sizes = [2, 8, 8], strides = [1, 1, 1]} : vector<2x8x32xf32> to vector<2x8x8xf32>
    %17 = vector.extract_strided_slice %11 {offsets = [0, 0, 0], sizes = [2, 8, 8], strides = [1, 1, 1]} : vector<2x8x32xf32> to vector<2x8x8xf32>
    "tpu.trace_start"() <{level = 10 : i32, message = "bsd,btd->bst"}> : () -> ()
    %cst_9 = arith.constant dense<0.000000e+00> : vector<2x8x8xf32>
    %18 = tpu.matmul %16, %17, %cst_9 {dimension_numbers = #tpu.dot_dimension_numbers<[2], [2], [1], [1], [0, 0, 0, 1, 1, 1], [0], [0]>} : vector<2x8x8xf32>, vector<2x8x8xf32>, vector<2x8x8xf32> -> vector<2x8x8xf32>
    "tpu.trace_stop"() : () -> ()
    %19 = arith.addf %18, %15 : vector<2x8x8xf32>
    %cst_10 = arith.constant dense<0xFF800000> : vector<2x8xf32>
    %20 = vector.multi_reduction <maximumf>, %19, %cst_10 [2] : vector<2x8x8xf32> to vector<2x8xf32>
    %21 = vector.shape_cast %20 : vector<2x8xf32> to vector<2x8x1xf32>
    %22 = vector.broadcast %21 : vector<2x8x1xf32> to vector<2x8x8xf32>
    %23 = arith.subf %19, %22 : vector<2x8x8xf32>
    %24 = math.exp %23 : vector<2x8x8xf32>
    %cst_11 = arith.constant dense<0.000000e+00> : vector<2x8xf32>
    %25 = vector.multi_reduction <add>, %24, %cst_11 [2] : vector<2x8x8xf32> to vector<2x8xf32>
    %26 = vector.shape_cast %25 : vector<2x8xf32> to vector<2x8x1xf32>
    %27 = tpu.reciprocal %26 : vector<2x8x1xf32> -> vector<2x8x1xf32>
    %28 = vector.broadcast %27 : vector<2x8x1xf32> to vector<2x8x8xf32>
    %29 = arith.mulf %24, %28 : vector<2x8x8xf32>
    %c0_12 = arith.constant 0 : index
    %c0_13 = arith.constant 0 : index
    %c0_14 = arith.constant 0 : index
    %c0_15 = arith.constant 0 : index
    %30 = vector.load %arg10[%c0_12, %c0_13, %c0_14, %c0_15] : memref<4x2x8x8xf32, #tpu.memory_space<vmem>>, vector<1x2x8x8xf32>
    %31 = vector.shape_cast %30 : vector<1x2x8x8xf32> to vector<2x8x8xf32>
    %32 = vector.shape_cast %29 : vector<2x8x8xf32> to vector<1x2x8x8xf32>
    tpu.vector_store %arg10[%c0_12, %c0_13, %c0_14, %c0_15], %32 {strides = array<i32>} : memref<4x2x8x8xf32, #tpu.memory_space<vmem>>, vector<1x2x8x8xf32>,
    %33 = vector.extract_strided_slice %10 {offsets = [0, 0, 8], sizes = [2, 8, 8], strides = [1, 1, 1]} : vector<2x8x32xf32> to vector<2x8x8xf32>
    %34 = vector.extract_strided_slice %11 {offsets = [0, 0, 8], sizes = [2, 8, 8], strides = [1, 1, 1]} : vector<2x8x32xf32> to vector<2x8x8xf32>
    "tpu.trace_start"() <{level = 10 : i32, message = "bsd,btd->bst"}> : () -> ()
    %cst_16 = arith.constant dense<0.000000e+00> : vector<2x8x8xf32>
    %35 = tpu.matmul %33, %34, %cst_16 {dimension_numbers = #tpu.dot_dimension_numbers<[2], [2], [1], [1], [0, 0, 0, 1, 1, 1], [0], [0]>} : vector<2x8x8xf32>, vector<2x8x8xf32>, vector<2x8x8xf32> -> vector<2x8x8xf32>
    "tpu.trace_stop"() : () -> ()
    %36 = arith.addf %35, %15 : vector<2x8x8xf32>
    %cst_17 = arith.constant dense<0xFF800000> : vector<2x8xf32>
    %37 = vector.multi_reduction <maximumf>, %36, %cst_17 [2] : vector<2x8x8xf32> to vector<2x8xf32>
    %38 = vector.shape_cast %37 : vector<2x8xf32> to vector<2x8x1xf32>
    %39 = vector.broadcast %38 : vector<2x8x1xf32> to vector<2x8x8xf32>
    %40 = arith.subf %36, %39 : vector<2x8x8xf32>
    %41 = math.exp %40 : vector<2x8x8xf32>
    %cst_18 = arith.constant dense<0.000000e+00> : vector<2x8xf32>
    %42 = vector.multi_reduction <add>, %41, %cst_18 [2] : vector<2x8x8xf32> to vector<2x8xf32>
    %43 = vector.shape_cast %42 : vector<2x8xf32> to vector<2x8x1xf32>
    %44 = tpu.reciprocal %43 : vector<2x8x1xf32> -> vector<2x8x1xf32>
    %45 = vector.broadcast %44 : vector<2x8x1xf32> to vector<2x8x8xf32>
    %46 = arith.mulf %41, %45 : vector<2x8x8xf32>
    %c1 = arith.constant 1 : index
    %c0_19 = arith.constant 0 : index
    %c0_20 = arith.constant 0 : index
    %c0_21 = arith.constant 0 : index
    %47 = vector.load %arg10[%c1, %c0_19, %c0_20, %c0_21] : memref<4x2x8x8xf32, #tpu.memory_space<vmem>>, vector<1x2x8x8xf32>
    %48 = vector.shape_cast %47 : vector<1x2x8x8xf32> to vector<2x8x8xf32>
    %49 = vector.shape_cast %46 : vector<2x8x8xf32> to vector<1x2x8x8xf32>
    tpu.vector_store %arg10[%c1, %c0_19, %c0_20, %c0_21], %49 {strides = array<i32>} : memref<4x2x8x8xf32, #tpu.memory_space<vmem>>, vector<1x2x8x8xf32>,
    %50 = vector.extract_strided_slice %10 {offsets = [0, 0, 16], sizes = [2, 8, 8], strides = [1, 1, 1]} : vector<2x8x32xf32> to vector<2x8x8xf32>
    %51 = vector.extract_strided_slice %11 {offsets = [0, 0, 16], sizes = [2, 8, 8], strides = [1, 1, 1]} : vector<2x8x32xf32> to vector<2x8x8xf32>
    "tpu.trace_start"() <{level = 10 : i32, message = "bsd,btd->bst"}> : () -> ()
    %cst_22 = arith.constant dense<0.000000e+00> : vector<2x8x8xf32>
    %52 = tpu.matmul %50, %51, %cst_22 {dimension_numbers = #tpu.dot_dimension_numbers<[2], [2], [1], [1], [0, 0, 0, 1, 1, 1], [0], [0]>} : vector<2x8x8xf32>, vector<2x8x8xf32>, vector<2x8x8xf32> -> vector<2x8x8xf32>
    "tpu.trace_stop"() : () -> ()
    %53 = arith.addf %52, %15 : vector<2x8x8xf32>
    %cst_23 = arith.constant dense<0xFF800000> : vector<2x8xf32>
    %54 = vector.multi_reduction <maximumf>, %53, %cst_23 [2] : vector<2x8x8xf32> to vector<2x8xf32>
    %55 = vector.shape_cast %54 : vector<2x8xf32> to vector<2x8x1xf32>
    %56 = vector.broadcast %55 : vector<2x8x1xf32> to vector<2x8x8xf32>
    %57 = arith.subf %53, %56 : vector<2x8x8xf32>
    %58 = math.exp %57 : vector<2x8x8xf32>
    %cst_24 = arith.constant dense<0.000000e+00> : vector<2x8xf32>
    %59 = vector.multi_reduction <add>, %58, %cst_24 [2] : vector<2x8x8xf32> to vector<2x8xf32>
    %60 = vector.shape_cast %59 : vector<2x8xf32> to vector<2x8x1xf32>
    %61 = tpu.reciprocal %60 : vector<2x8x1xf32> -> vector<2x8x1xf32>
    %62 = vector.broadcast %61 : vector<2x8x1xf32> to vector<2x8x8xf32>
    %63 = arith.mulf %58, %62 : vector<2x8x8xf32>
    %c2 = arith.constant 2 : index
    %c0_25 = arith.constant 0 : index
    %c0_26 = arith.constant 0 : index
    %c0_27 = arith.constant 0 : index
    %64 = vector.load %arg10[%c2, %c0_25, %c0_26, %c0_27] : memref<4x2x8x8xf32, #tpu.memory_space<vmem>>, vector<1x2x8x8xf32>
    %65 = vector.shape_cast %64 : vector<1x2x8x8xf32> to vector<2x8x8xf32>
    %66 = vector.shape_cast %63 : vector<2x8x8xf32> to vector<1x2x8x8xf32>
    tpu.vector_store %arg10[%c2, %c0_25, %c0_26, %c0_27], %66 {strides = array<i32>} : memref<4x2x8x8xf32, #tpu.memory_space<vmem>>, vector<1x2x8x8xf32>,
    %67 = vector.extract_strided_slice %10 {offsets = [0, 0, 24], sizes = [2, 8, 8], strides = [1, 1, 1]} : vector<2x8x32xf32> to vector<2x8x8xf32>
    %68 = vector.extract_strided_slice %11 {offsets = [0, 0, 24], sizes = [2, 8, 8], strides = [1, 1, 1]} : vector<2x8x32xf32> to vector<2x8x8xf32>
    "tpu.trace_start"() <{level = 10 : i32, message = "bsd,btd->bst"}> : () -> ()
    %cst_28 = arith.constant dense<0.000000e+00> : vector<2x8x8xf32>
    %69 = tpu.matmul %67, %68, %cst_28 {dimension_numbers = #tpu.dot_dimension_numbers<[2], [2], [1], [1], [0, 0, 0, 1, 1, 1], [0], [0]>} : vector<2x8x8xf32>, vector<2x8x8xf32>, vector<2x8x8xf32> -> vector<2x8x8xf32>
    "tpu.trace_stop"() : () -> ()
    %70 = arith.addf %69, %15 : vector<2x8x8xf32>
    %cst_29 = arith.constant dense<0xFF800000> : vector<2x8xf32>
    %71 = vector.multi_reduction <maximumf>, %70, %cst_29 [2] : vector<2x8x8xf32> to vector<2x8xf32>
    %72 = vector.shape_cast %71 : vector<2x8xf32> to vector<2x8x1xf32>
    %73 = vector.broadcast %72 : vector<2x8x1xf32> to vector<2x8x8xf32>
    %74 = arith.subf %70, %73 : vector<2x8x8xf32>
    %75 = math.exp %74 : vector<2x8x8xf32>
    %cst_30 = arith.constant dense<0.000000e+00> : vector<2x8xf32>
    %76 = vector.multi_reduction <add>, %75, %cst_30 [2] : vector<2x8x8xf32> to vector<2x8xf32>
    %77 = vector.shape_cast %76 : vector<2x8xf32> to vector<2x8x1xf32>
    %78 = tpu.reciprocal %77 : vector<2x8x1xf32> -> vector<2x8x1xf32>
    %79 = vector.broadcast %78 : vector<2x8x1xf32> to vector<2x8x8xf32>
    %80 = arith.mulf %75, %79 : vector<2x8x8xf32>
    %c3 = arith.constant 3 : index
    %c0_31 = arith.constant 0 : index
    %c0_32 = arith.constant 0 : index
    %c0_33 = arith.constant 0 : index
    %81 = vector.load %arg10[%c3, %c0_31, %c0_32, %c0_33] : memref<4x2x8x8xf32, #tpu.memory_space<vmem>>, vector<1x2x8x8xf32>
    %82 = vector.shape_cast %81 : vector<1x2x8x8xf32> to vector<2x8x8xf32>
    %83 = vector.shape_cast %80 : vector<2x8x8xf32> to vector<1x2x8x8xf32>
    tpu.vector_store %arg10[%c3, %c0_31, %c0_32, %c0_33], %83 {strides = array<i32>} : memref<4x2x8x8xf32, #tpu.memory_space<vmem>>, vector<1x2x8x8xf32>,
    %c0_34 = arith.constant 0 : index
    %c0_35 = arith.constant 0 : index
    %84 = vector.load %arg4[%c0_34, %c0_35] : memref<32x64xf32, #tpu.memory_space<vmem>>, vector<32x64xf32>
    %cst_36 = arith.constant dense<0.000000e+00> : vector<16x64xf32>
    %85 = tpu.matmul %1, %84, %cst_36 {dimension_numbers = #tpu.dot_dimension_numbers<[1], [0], [0], [1], [0, 0, 1, 1], [], []>} : vector<16x32xf32>, vector<32x64xf32>, vector<16x64xf32> -> vector<16x64xf32>
    %c0_37 = arith.constant 0 : index
    %c0_38 = arith.constant 0 : index
    %86 = vector.load %arg5[%c0_37, %c0_38] : memref<1x64xf32, #tpu.memory_space<vmem>>, vector<1x64xf32>
    %87 = vector.broadcast %86 : vector<1x64xf32> to vector<16x64xf32>
    %88 = arith.addf %85, %87 : vector<16x64xf32>
    %cst_39 = arith.constant 0.000000e+00 : f32
    %89 = vector.broadcast %cst_39 : f32 to vector<16x64xf32>
    %90 = arith.maximumf %88, %89 : vector<16x64xf32>
    %c0_40 = arith.constant 0 : index
    %c0_41 = arith.constant 0 : index
    %91 = vector.load %arg6[%c0_40, %c0_41] : memref<64x32xf32, #tpu.memory_space<vmem>>, vector<64x32xf32>
    %cst_42 = arith.constant dense<0.000000e+00> : vector<16x32xf32>
    %92 = tpu.matmul %90, %91, %cst_42 {dimension_numbers = #tpu.dot_dimension_numbers<[1], [0], [0], [1], [0, 0, 1, 1], [], []>} : vector<16x64xf32>, vector<64x32xf32>, vector<16x32xf32> -> vector<16x32xf32>
    %c0_43 = arith.constant 0 : index
    %c0_44 = arith.constant 0 : index
    %93 = vector.load %arg7[%c0_43, %c0_44] : memref<1x32xf32, #tpu.memory_space<vmem>>, vector<1x32xf32>
    %94 = vector.broadcast %93 : vector<1x32xf32> to vector<16x32xf32>
    %95 = arith.addf %92, %94 : vector<16x32xf32>
    %96 = arith.addf %1, %95 : vector<16x32xf32>
    %cst_45 = arith.constant dense<0.000000e+00> : vector<16xf32>
    %97 = vector.multi_reduction <add>, %96, %cst_45 [1] : vector<16x32xf32> to vector<16xf32>
    %98 = vector.shape_cast %97 : vector<16xf32> to vector<16x1xf32>
    %cst_46 = arith.constant 3.200000e+01 : f32
    %99 = vector.broadcast %cst_46 : f32 to vector<16x1xf32>
    %100 = arith.divf %98, %99 : vector<16x1xf32>
    %101 = vector.broadcast %100 : vector<16x1xf32> to vector<16x32xf32>
    %102 = arith.subf %96, %101 : vector<16x32xf32>
    %103 = arith.mulf %102, %102 : vector<16x32xf32>
    %cst_47 = arith.constant dense<0.000000e+00> : vector<16xf32>
    %104 = vector.multi_reduction <add>, %103, %cst_47 [1] : vector<16x32xf32> to vector<16xf32>
    %105 = vector.shape_cast %104 : vector<16xf32> to vector<16x1xf32>
    %cst_48 = arith.constant 3.200000e+01 : f32
    %106 = vector.broadcast %cst_48 : f32 to vector<16x1xf32>
    %107 = arith.divf %105, %106 : vector<16x1xf32>
    %108 = vector.broadcast %100 : vector<16x1xf32> to vector<16x32xf32>
    %109 = arith.subf %96, %108 : vector<16x32xf32>
    %cst_49 = arith.constant 9.99999974E-6 : f32
    %110 = vector.broadcast %cst_49 : f32 to vector<16x1xf32>
    %111 = arith.addf %107, %110 : vector<16x1xf32>
    %112 = math.rsqrt %111 : vector<16x1xf32>
    %113 = vector.broadcast %112 : vector<16x1xf32> to vector<16x32xf32>
    %114 = arith.mulf %109, %113 : vector<16x32xf32>
    %c0_50 = arith.constant 0 : index
    %c0_51 = arith.constant 0 : index
    %115 = vector.load %arg8[%c0_50, %c0_51] : memref<1x32xf32, #tpu.memory_space<vmem>>, vector<1x32xf32>
    %116 = vector.broadcast %115 : vector<1x32xf32> to vector<16x32xf32>
    %117 = arith.mulf %114, %116 : vector<16x32xf32>
    %c0_52 = arith.constant 0 : index
    %c0_53 = arith.constant 0 : index
    %118 = vector.load %arg9[%c0_52, %c0_53] : memref<1x32xf32, #tpu.memory_space<vmem>>, vector<1x32xf32>
    %119 = vector.broadcast %118 : vector<1x32xf32> to vector<16x32xf32>
    %120 = arith.addf %117, %119 : vector<16x32xf32>
    %121 = vector.shape_cast %120 : vector<16x32xf32> to vector<2x8x32xf32>
    %c0_54 = arith.constant 0 : index
    %c0_55 = arith.constant 0 : index
    %c0_56 = arith.constant 0 : index
    %122 = vector.load %arg11[%c0_54, %c0_55, %c0_56] : memref<2x8x32xf32, #tpu.memory_space<vmem>>, vector<2x8x32xf32>
    tpu.vector_store %arg11[%c0_54, %c0_55, %c0_56], %121 {strides = array<i32>} : memref<2x8x32xf32, #tpu.memory_space<vmem>>, vector<2x8x32xf32>,
    return
  }
}

</mosaic_0001>

<llo_original>
// kernel: encoder_layer.1
$region0: #{encoder_layer.1}
  #allocation0 [shape = 'u32[]', space=smem, size = 0x4, offset = 0x4, fixed_abs, tag = 'smem constant byte address 0x4 - core index']
  #allocation1 [shape = 'u32[144,128]{1,0:T(1,128)}', space=vmem, size = 0x12000, scoped, tag = 'internal scratch']
  %s0 = inlined_call_operand.vmem [shape: f32[2,8,32], index: 0, kind: input, shape index: {}]
  %s1 = inlined_call_operand.vmem [shape: f32[2,8], index: 1, kind: input, shape index: {}]
  %s2 = inlined_call_operand.vmem [shape: f32[32,64], index: 2, kind: input, shape index: {}]
  %s3 = inlined_call_operand.vmem [shape: f32[1,64], index: 3, kind: input, shape index: {}]
  %s4 = inlined_call_operand.vmem [shape: f32[32,64], index: 4, kind: input, shape index: {}]
  %s5 = inlined_call_operand.vmem [shape: f32[1,64], index: 5, kind: input, shape index: {}]
  %s6 = inlined_call_operand.vmem [shape: f32[64,32], index: 6, kind: input, shape index: {}]
  %s7 = inlined_call_operand.vmem [shape: f32[1,32], index: 7, kind: input, shape index: {}]
  %s8 = inlined_call_operand.vmem [shape: f32[1,32], index: 8, kind: input, shape index: {}]
  %s9 = inlined_call_operand.vmem [shape: f32[1,32], index: 9, kind: input, shape index: {}]
  %s10 = inlined_call_operand.vmem [shape: f32[4,2,8,8], index: 10, kind: output, shape index: {0}]
  %s11 = inlined_call_operand.hbm [shape: f32[2,8,32], index: 11, kind: output, shape index: {1}]
  %12 = xla_tuple %s10, %s11
  %s13 = sld [smem:[#allocation0]]
  $region58: #{encoder_layer.1} parent=0
    _
  %s15 = ssub.s32 1, %s13
  %s16 = scalar_select 0, %s15, %s13
  $region1: #{encoder_layer.1} parent=0
    #allocation2 [shape = 'u8[8192]{0}', space=vmem, size = 0x2000, scoped, tag = 'output window, operand 1, single buffered']
    #allocation3 [shape = 's32[1]{0}', space=sflag, size = 0x4, scoped, tag = 'scoped memory for encoder_layer.1']
    %17 = vsyncpa [#allocation3], 0
    // Predicated region
    $region2: #{encoder_layer.1} parent=1 // pred_check
      _
    $region3: #{encoder_layer.1} parent=1 // pred_check_branch
      %19 = sbr.rel (0) target = $region5
    $region4: #{encoder_layer.1} parent=1 // pred_region
      _
    $region5: #{encoder_layer.1} parent=1 // pred_fallthru
      _
    // Predicated region
    $region6: #{encoder_layer.1} parent=1 // pred_check
      _
    $region7: #{encoder_layer.1} parent=1 // pred_check_branch
      %21 = sbr.rel (0) target = $region9
    $region8: #{encoder_layer.1} parent=1 // pred_region
      _
    $region9: #{encoder_layer.1} parent=1 // pred_fallthru
      _
    // Predicated region
    $region10: #{encoder_layer.1} parent=1 // pred_check
      _
    $region11: #{encoder_layer.1} parent=1 // pred_check_branch
      %23 = sbr.rel (0) target = $region13
    $region12: #{encoder_layer.1} parent=1 // pred_region
      _
    $region13: #{encoder_layer.1} parent=1 // pred_fallthru
      _
    // Predicated region
    $region14: #{encoder_layer.1} parent=1 // pred_check
      _
    $region15: #{encoder_layer.1} parent=1 // pred_check_branch
      %25 = sbr.rel (0) target = $region17
    $region16: #{encoder_layer.1} parent=1 // pred_region
      _
    $region17: #{encoder_layer.1} parent=1 // pred_fallthru
      _
    // Predicated region
    $region18: #{encoder_layer.1} parent=1 // pred_check
      _
    $region19: #{encoder_layer.1} parent=1 // pred_check_branch
      %27 = sbr.rel (0) target = $region21
    $region20: #{encoder_layer.1} parent=1 // pred_region
      _
    $region21: #{encoder_layer.1} parent=1 // pred_fallthru
      _
    // Predicated region
    $region22: #{encoder_layer.1} parent=1 // pred_check
      _
    $region23: #{encoder_layer.1} parent=1 // pred_check_branch
      %29 = sbr.rel (0) target = $region25
    $region24: #{encoder_layer.1} parent=1 // pred_region
      _
    $region25: #{encoder_layer.1} parent=1 // pred_fallthru
      _
    // Predicated region
    $region26: #{encoder_layer.1} parent=1 // pred_check
      _
    $region27: #{encoder_layer.1} parent=1 // pred_check_branch
      %31 = sbr.rel (0) target = $region29
    $region28: #{encoder_layer.1} parent=1 // pred_region
      _
    $region29: #{encoder_layer.1} parent=1 // pred_fallthru
      _
    // Predicated region
    $region30: #{encoder_layer.1} parent=1 // pred_check
      _
    $region31: #{encoder_layer.1} parent=1 // pred_check_branch
      %33 = sbr.rel (0) target = $region33
    $region32: #{encoder_layer.1} parent=1 // pred_region
      _
    $region33: #{encoder_layer.1} parent=1 // pred_fallthru
      _
    // Predicated region
    $region34: #{encoder_layer.1} parent=1 // pred_check
      _
    $region35: #{encoder_layer.1} parent=1 // pred_check_branch
      %35 = sbr.rel (0) target = $region37
    $region36: #{encoder_layer.1} parent=1 // pred_region
      _
    $region37: #{encoder_layer.1} parent=1 // pred_fallthru
      _
    // Predicated region
    $region38: #{encoder_layer.1} parent=1 // pred_check
      _
    $region39: #{encoder_layer.1} parent=1 // pred_check_branch
      %37 = sbr.rel (0) target = $region41
    $region40: #{encoder_layer.1} parent=1 // pred_region
      _
    $region41: #{encoder_layer.1} parent=1 // pred_fallthru
      _
    %v38 = vld [vmem:[%s0] sm:$0xff]
    %v39 = vld [vmem:[%s0 + $0x8] sm:$0xff]
    %v40 = vld [vmem:[%s2] sm:$0xff]
    %v41 = vld [vmem:[%s2 + $0x8] sm:$0xff]
    %v42 = vld [vmem:[%s2 + $0x10] sm:$0xff]
    %v43 = vld [vmem:[%s2 + $0x18] sm:$0xff]
    %v44 = vld [vmem:[%s3] sm:$0x1]
    %v46 = vlaneseq
    %v47 = vshrl.u32 %v46, 7
    %v48 = vsub.s32 0, %v47
    %v49 = vrot.slane %v44, %v48
    %vm51 = vcmask 261120
    %v53 = vsel %vm51, %v38, 0
    %v56 = vsel %vm51, %v39, 0
    %58 = vmatprep.subr.mxu0 0.0
    %59 = vmatpush1.msra.mxu0 0.0
    %60 = vmatprep.subr.mxu0 0.0
    %61 = vmatpush1.msra.mxu0 0.0
    %62 = vmatprep.subr.mxu0 0.0
    %63 = vmatpush1.msra.mxu0 0.0
    %64 = vmatprep.subr.mxu0 0.0
    %65 = vmatpush1.msra.mxu0 0.0
    %66 = vmatprep.subr.mxu0 0.0
    %67 = vmatpush1.msra.mxu0 0.0
    %68 = vmatprep.subr.mxu0 0.0
    %69 = vmatpush1.msra.mxu0 0.0
    %70 = vmatprep.subr.mxu0 0.0
    %71 = vmatpush1.msra.mxu0 0.0
    %72 = vmatprep.subr.mxu0 0.0
    %73 = vmatpush1.msra.mxu0 0.0
    %74 = vmatprep.subr.mxu0 0.0
    %75 = vmatpush1.msra.mxu0 0.0
    %76 = vmatprep.subr.mxu0 0.0
    %77 = vmatpush1.msra.mxu0 0.0
    %78 = vmatprep.subr.mxu0 0.0
    %79 = vmatpush1.msra.mxu0 0.0
    %80 = vmatprep.subr.mxu0 0.0
    %81 = vmatpush1.msra.mxu0 0.0
    %82 = vmatprep.subr.mxu0 0.0
    %83 = vmatpush1.msra.mxu0 %v43
    %84 = vmatprep.subr.mxu0 0.0
    %85 = vmatpush1.msra.mxu0 %v42
    %86 = vmatprep.subr.mxu0 0.0
    %87 = vmatpush1.msra.mxu0 %v41
    %88 = vmatprep.subr.mxu0 0.0
    %89 = vmatpush1.msra.mxu0 %v40
    %90 = vmatprep.subr.mxu0 0.0
    %91 = vmatpush2.msra.mxu0 0.0
    %92 = vmatprep.subr.mxu0 0.0
    %93 = vmatpush2.msra.mxu0 0.0
    %94 = vmatprep.subr.mxu0 0.0
    %95 = vmatpush2.msra.mxu0 0.0
    %96 = vmatprep.subr.mxu0 0.0
    %97 = vmatpush2.msra.mxu0 0.0
    %98 = vmatprep.subr.mxu0 0.0
    %99 = vmatpush2.msra.mxu0 0.0
    %100 = vmatprep.subr.mxu0 0.0
    %101 = vmatpush2.msra.mxu0 0.0
    %102 = vmatprep.subr.mxu0 0.0
    %103 = vmatpush2.msra.mxu0 0.0
    %104 = vmatprep.subr.mxu0 0.0
    %105 = vmatpush2.msra.mxu0 0.0
    %106 = vmatprep.subr.mxu0 0.0
    %107 = vmatpush2.msra.mxu0 0.0
    %108 = vmatprep.subr.mxu0 0.0
    %109 = vmatpush2.msra.mxu0 0.0
    %110 = vmatprep.subr.mxu0 0.0
    %111 = vmatpush2.msra.mxu0 0.0
    %112 = vmatprep.subr.mxu0 0.0
    %113 = vmatpush2.msra.mxu0 0.0
    %114 = vmatprep.subr.mxu0 0.0
    %115 = vmatpush2.msra.mxu0 0.0
    %116 = vmatprep.subr.mxu0 0.0
    %117 = vmatpush2.msra.mxu0 0.0
    %118 = vmatprep.subr.mxu0 0.0
    %119 = vmatpush2.msra.mxu0 0.0
    %120 = vmatprep.subr.mxu0 0.0
    %121 = vmatpush2.msra.mxu0 0.0
    %122 = vmatprep.mubr.f32.mxu0 0.0
    %123 = vmatmul.mubr.f32.gmra.mxu0 %v53
    %v124 = vpop.f32.mrf.mxu0
    %v125 = vadd.f32 %v49, %v124
    %v126 = vpop.f32.mrf.mxu0
    %127 = vmatprep.mubr.f32.mxu0 0.0
    %128 = vmatmul.mubr.f32.gmra.mxu0 %v56
    %v129 = vpop.f32.mrf.mxu0
    %v130 = vadd.f32 %v49, %v129
    %v131 = vpop.f32.mrf.mxu0
    %132 = vdwg.mxu0
    %v133 = vmul.f32 %v125, 0.35355338
    %v134 = vmul.f32 %v130, 0.35355338
    %v135 = vld [vmem:[%s1] sm:$0x3]
    %v138 = vunpack.c.l.s4 1966171168
    %v139 = vunpack.c.0.s8 %v138
    %v140 = vlaneseq
    %v141 = vshrl.u32 %v140, 7
    %v142 = vsub.s32 %v139, %v141
    %v143 = vrot.slane %v135, %v142
    %v144 = vcombine.high %v143, %v143
    %v146 = vunpack.c.l.s4 1966171168
    %v147 = vunpack.c.0.s8 %v146
    %v148 = vlaneseq
    %v149 = vshrl.u32 %v148, 7
    %v150 = vsub.s32 %v147, %v149
    %v151 = vrot.slane %v143, %v150
    %v153 = vunpack.c.l.s4 1966171168
    %v154 = vunpack.c.0.s8 %v153
    %v155 = vlaneseq
    %v156 = vshrl.u32 %v155, 7
    %v157 = vsub.s32 %v154, %v156
    %v158 = vrot.slane %v144, %v157
    %v159 = vlaneseq
    %v160 = vshrl.u32 %v159, 7
    %v161 = vsub.s32 0, %v160
    %v162 = vrot.slane %v151, %v161
    %v163 = vlaneseq
    %v164 = vshrl.u32 %v163, 7
    %v165 = vsub.s32 0, %v164
    %v166 = vrot.slane %v158, %v165
    %170 = vrot.lane.b32.xlu0 %v125, 96
    %v171 = vpop.permute.xlu0 %170
    %vm172 = vcmask 64512
    %v174 = vsel %vm172, %v133, 0
    %v176 = vsel %vm172, %v171, 0
    %178 = vmatprep.subr.mxu0 0.0
    %179 = vmatpush1.xpose.msra.mxu0 0.0
    %180 = vmatprep.subr.mxu0 0.0
    %181 = vmatpush1.xpose.msra.mxu0 0.0
    %182 = vmatprep.subr.mxu0 0.0
    %183 = vmatpush1.xpose.msra.mxu0 0.0
    %184 = vmatprep.subr.mxu0 0.0
    %185 = vmatpush1.xpose.msra.mxu0 0.0
    %186 = vmatprep.subr.mxu0 0.0
    %187 = vmatpush1.xpose.msra.mxu0 0.0
    %188 = vmatprep.subr.mxu0 0.0
    %189 = vmatpush1.xpose.msra.mxu0 0.0
    %190 = vmatprep.subr.mxu0 0.0
    %191 = vmatpush1.xpose.msra.mxu0 0.0
    %192 = vmatprep.subr.mxu0 0.0
    %193 = vmatpush1.xpose.msra.mxu0 0.0
    %194 = vmatprep.subr.mxu0 0.0
    %195 = vmatpush1.xpose.msra.mxu0 0.0
    %196 = vmatprep.subr.mxu0 0.0
    %197 = vmatpush1.xpose.msra.mxu0 0.0
    %198 = vmatprep.subr.mxu0 0.0
    %199 = vmatpush1.xpose.msra.mxu0 0.0
    %200 = vmatprep.subr.mxu0 0.0
    %201 = vmatpush1.xpose.msra.mxu0 0.0
    %202 = vmatprep.subr.mxu0 0.0
    %203 = vmatpush1.xpose.msra.mxu0 0.0
    %204 = vmatprep.subr.mxu0 0.0
    %205 = vmatpush1.xpose.msra.mxu0 0.0
    %206 = vmatprep.subr.mxu0 0.0
    %207 = vmatpush1.xpose.msra.mxu0 0.0
    %208 = vmatprep.subr.mxu0 0.0
    %209 = vmatpush1.xpose.msra.mxu0 %v176
    %210 = vmatprep.subr.mxu0 0.0
    %211 = vmatpush2.xpose.msra.mxu0 0.0
    %212 = vmatprep.subr.mxu0 0.0
    %213 = vmatpush2.xpose.msra.mxu0 0.0
    %214 = vmatprep.subr.mxu0 0.0
    %215 = vmatpush2.xpose.msra.mxu0 0.0
    %216 = vmatprep.subr.mxu0 0.0
    %217 = vmatpush2.xpose.msra.mxu0 0.0
    %218 = vmatprep.subr.mxu0 0.0
    %219 = vmatpush2.xpose.msra.mxu0 0.0
    %220 = vmatprep.subr.mxu0 0.0
    %221 = vmatpush2.xpose.msra.mxu0 0.0
    %222 = vmatprep.subr.mxu0 0.0
    %223 = vmatpush2.xpose.msra.mxu0 0.0
    %224 = vmatprep.subr.mxu0 0.0
    %225 = vmatpush2.xpose.msra.mxu0 0.0
    %226 = vmatprep.subr.mxu0 0.0
    %227 = vmatpush2.xpose.msra.mxu0 0.0
    %228 = vmatprep.subr.mxu0 0.0
    %229 = vmatpush2.xpose.msra.mxu0 0.0
    %230 = vmatprep.subr.mxu0 0.0
    %231 = vmatpush2.xpose.msra.mxu0 0.0
    %232 = vmatprep.subr.mxu0 0.0
    %233 = vmatpush2.xpose.msra.mxu0 0.0
    %234 = vmatprep.subr.mxu0 0.0
    %235 = vmatpush2.xpose.msra.mxu0 0.0
    %236 = vmatprep.subr.mxu0 0.0
    %237 = vmatpush2.xpose.msra.mxu0 0.0
    %238 = vmatprep.subr.mxu0 0.0
    %239 = vmatpush2.xpose.msra.mxu0 0.0
    %240 = vmatprep.subr.mxu0 0.0
    %241 = vmatpush2.xpose.msra.mxu0 0.0
    %242 = vmatprep.mubr.f32.mxu0 0.0
    %243 = vmatmul.mubr.f32.gmra.mxu0 %v174
    %v244 = vpop.f32.mrf.mxu0
    %v245 = vadd.f32 %v162, %v244
    %v246 = vpop.f32.mrf.mxu0
    %247 = vdwg.mxu0
    %249 = vrot.lane.b32.xlu0 %v130, 96
    %v250 = vpop.permute.xlu0 %249
    %v252 = vsel %vm172, %v134, 0
    %v254 = vsel %vm172, %v250, 0
    %256 = vmatprep.subr.mxu0 0.0
    %257 = vmatpush1.xpose.msra.mxu0 0.0
    %258 = vmatprep.subr.mxu0 0.0
    %259 = vmatpush1.xpose.msra.mxu0 0.0
    %260 = vmatprep.subr.mxu0 0.0
    %261 = vmatpush1.xpose.msra.mxu0 0.0
    %262 = vmatprep.subr.mxu0 0.0
    %263 = vmatpush1.xpose.msra.mxu0 0.0
    %264 = vmatprep.subr.mxu0 0.0
    %265 = vmatpush1.xpose.msra.mxu0 0.0
    %266 = vmatprep.subr.mxu0 0.0
    %267 = vmatpush1.xpose.msra.mxu0 0.0
    %268 = vmatprep.subr.mxu0 0.0
    %269 = vmatpush1.xpose.msra.mxu0 0.0
    %270 = vmatprep.subr.mxu0 0.0
    %271 = vmatpush1.xpose.msra.mxu0 0.0
    %272 = vmatprep.subr.mxu0 0.0
    %273 = vmatpush1.xpose.msra.mxu0 0.0
    %274 = vmatprep.subr.mxu0 0.0
    %275 = vmatpush1.xpose.msra.mxu0 0.0
    %276 = vmatprep.subr.mxu0 0.0
    %277 = vmatpush1.xpose.msra.mxu0 0.0
    %278 = vmatprep.subr.mxu0 0.0
    %279 = vmatpush1.xpose.msra.mxu0 0.0
    %280 = vmatprep.subr.mxu0 0.0
    %281 = vmatpush1.xpose.msra.mxu0 0.0
    %282 = vmatprep.subr.mxu0 0.0
    %283 = vmatpush1.xpose.msra.mxu0 0.0
    %284 = vmatprep.subr.mxu0 0.0
    %285 = vmatpush1.xpose.msra.mxu0 0.0
    %286 = vmatprep.subr.mxu0 0.0
    %287 = vmatpush1.xpose.msra.mxu0 %v254
    %288 = vmatprep.subr.mxu0 0.0
    %289 = vmatpush2.xpose.msra.mxu0 0.0
    %290 = vmatprep.subr.mxu0 0.0
    %291 = vmatpush2.xpose.msra.mxu0 0.0
    %292 = vmatprep.subr.mxu0 0.0
    %293 = vmatpush2.xpose.msra.mxu0 0.0
    %294 = vmatprep.subr.mxu0 0.0
    %295 = vmatpush2.xpose.msra.mxu0 0.0
    %296 = vmatprep.subr.mxu0 0.0
    %297 = vmatpush2.xpose.msra.mxu0 0.0
    %298 = vmatprep.subr.mxu0 0.0
    %299 = vmatpush2.xpose.msra.mxu0 0.0
    %300 = vmatprep.subr.mxu0 0.0
    %301 = vmatpush2.xpose.msra.mxu0 0.0
    %302 = vmatprep.subr.mxu0 0.0
    %303 = vmatpush2.xpose.msra.mxu0 0.0
    %304 = vmatprep.subr.mxu0 0.0
    %305 = vmatpush2.xpose.msra.mxu0 0.0
    %306 = vmatprep.subr.mxu0 0.0
    %307 = vmatpush2.xpose.msra.mxu0 0.0
    %308 = vmatprep.subr.mxu0 0.0
    %309 = vmatpush2.xpose.msra.mxu0 0.0
    %310 = vmatprep.subr.mxu0 0.0
    %311 = vmatpush2.xpose.msra.mxu0 0.0
    %312 = vmatprep.subr.mxu0 0.0
    %313 = vmatpush2.xpose.msra.mxu0 0.0
    %314 = vmatprep.subr.mxu0 0.0
    %315 = vmatpush2.xpose.msra.mxu0 0.0
    %316 = vmatprep.subr.mxu0 0.0
    %317 = vmatpush2.xpose.msra.mxu0 0.0
    %318 = vmatprep.subr.mxu0 0.0
    %319 = vmatpush2.xpose.msra.mxu0 0.0
    %320 = vmatprep.mubr.f32.mxu0 0.0
    %321 = vmatmul.mubr.f32.gmra.mxu0 %v252
    %v322 = vpop.f32.mrf.mxu0
    %v323 = vadd.f32 %v166, %v322
    %v324 = vpop.f32.mrf.mxu0
    %325 = vdwg.mxu0
    %v326 = vsel %vm172, %v245, -inf
    %327 = vmax.xlane.f32.xlu0 %v326
    %v328 = vpop.xlane.xlu0 %327
    %v329 = vsel %vm172, %v323, -inf
    %330 = vmax.xlane.f32.xlu0 %v329
    %v331 = vpop.xlane.xlu0 %330
    %v332 = vsub.f32 %v245, %v328
    %v333 = vsub.f32 %v323, %v331
    %v334 = vmul.f32 %v332, 1.442695
    %v335 = vpow.pop %v334
    %v336 = vmul.f32 %v333, 1.442695
    %v337 = vpow.pop %v336
    %v338 = vsel %vm172, %v335, 0.0
    %339 = vadd.xlane.f32.xlu0 %v338
    %v340 = vpop.xlane.xlu0 %339
    %v341 = vsel %vm172, %v337, 0.0
    %342 = vadd.xlane.f32.xlu0 %v341
    %v343 = vpop.xlane.xlu0 %342
    %v344 = vrcp.pop %v340
    %v345 = vrcp.pop %v343
    %v346 = vmul.f32 %v335, %v344
    %v347 = vmul.f32 %v337, %v345
    %348 = vst.msk [vmem:[%s10] sm:$0xff] %vm172, %v346
    %349 = vst.msk [vmem:[%s10 + $0x8] sm:$0xff] %vm172, %v347
    %350 = vrot.lane.b32.xlu0 %v133, 120
    %v351 = vpop.permute.xlu0 %350
    %352 = vrot.lane.b32.xlu0 %v125, 88
    %v353 = vpop.permute.xlu0 %352
    %v354 = vsel %vm172, %v351, 0
    %v356 = vsel %vm172, %v353, 0
    %358 = vmatprep.subr.mxu0 0.0
    %359 = vmatpush1.xpose.msra.mxu0 0.0
    %360 = vmatprep.subr.mxu0 0.0
    %361 = vmatpush1.xpose.msra.mxu0 0.0
    %362 = vmatprep.subr.mxu0 0.0
    %363 = vmatpush1.xpose.msra.mxu0 0.0
    %364 = vmatprep.subr.mxu0 0.0
    %365 = vmatpush1.xpose.msra.mxu0 0.0
    %366 = vmatprep.subr.mxu0 0.0
    %367 = vmatpush1.xpose.msra.mxu0 0.0
    %368 = vmatprep.subr.mxu0 0.0
    %369 = vmatpush1.xpose.msra.mxu0 0.0
    %370 = vmatprep.subr.mxu0 0.0
    %371 = vmatpush1.xpose.msra.mxu0 0.0
    %372 = vmatprep.subr.mxu0 0.0
    %373 = vmatpush1.xpose.msra.mxu0 0.0
    %374 = vmatprep.subr.mxu0 0.0
    %375 = vmatpush1.xpose.msra.mxu0 0.0
    %376 = vmatprep.subr.mxu0 0.0
    %377 = vmatpush1.xpose.msra.mxu0 0.0
    %378 = vmatprep.subr.mxu0 0.0
    %379 = vmatpush1.xpose.msra.mxu0 0.0
    %380 = vmatprep.subr.mxu0 0.0
    %381 = vmatpush1.xpose.msra.mxu0 0.0
    %382 = vmatprep.subr.mxu0 0.0
    %383 = vmatpush1.xpose.msra.mxu0 0.0
    %384 = vmatprep.subr.mxu0 0.0
    %385 = vmatpush1.xpose.msra.mxu0 0.0
    %386 = vmatprep.subr.mxu0 0.0
    %387 = vmatpush1.xpose.msra.mxu0 0.0
    %388 = vmatprep.subr.mxu0 0.0
    %389 = vmatpush1.xpose.msra.mxu0 %v356
    %390 = vmatprep.subr.mxu0 0.0
    %391 = vmatpush2.xpose.msra.mxu0 0.0
    %392 = vmatprep.subr.mxu0 0.0
    %393 = vmatpush2.xpose.msra.mxu0 0.0
    %394 = vmatprep.subr.mxu0 0.0
    %395 = vmatpush2.xpose.msra.mxu0 0.0
    %396 = vmatprep.subr.mxu0 0.0
    %397 = vmatpush2.xpose.msra.mxu0 0.0
    %398 = vmatprep.subr.mxu0 0.0
    %399 = vmatpush2.xpose.msra.mxu0 0.0
    %400 = vmatprep.subr.mxu0 0.0
    %401 = vmatpush2.xpose.msra.mxu0 0.0
    %402 = vmatprep.subr.mxu0 0.0
    %403 = vmatpush2.xpose.msra.mxu0 0.0
    %404 = vmatprep.subr.mxu0 0.0
    %405 = vmatpush2.xpose.msra.mxu0 0.0
    %406 = vmatprep.subr.mxu0 0.0
    %407 = vmatpush2.xpose.msra.mxu0 0.0
    %408 = vmatprep.subr.mxu0 0.0
    %409 = vmatpush2.xpose.msra.mxu0 0.0
    %410 = vmatprep.subr.mxu0 0.0
    %411 = vmatpush2.xpose.msra.mxu0 0.0
    %412 = vmatprep.subr.mxu0 0.0
    %413 = vmatpush2.xpose.msra.mxu0 0.0
    %414 = vmatprep.subr.mxu0 0.0
    %415 = vmatpush2.xpose.msra.mxu0 0.0
    %416 = vmatprep.subr.mxu0 0.0
    %417 = vmatpush2.xpose.msra.mxu0 0.0
    %418 = vmatprep.subr.mxu0 0.0
    %419 = vmatpush2.xpose.msra.mxu0 0.0
    %420 = vmatprep.subr.mxu0 0.0
    %421 = vmatpush2.xpose.msra.mxu0 0.0
    %422 = vmatprep.mubr.f32.mxu0 0.0
    %423 = vmatmul.mubr.f32.gmra.mxu0 %v354
    %v424 = vpop.f32.mrf.mxu0
    %v425 = vadd.f32 %v162, %v424
    %v426 = vpop.f32.mrf.mxu0
    %427 = vdwg.mxu0
    %428 = vrot.lane.b32.xlu0 %v134, 120
    %v429 = vpop.permute.xlu0 %428
    %430 = vrot.lane.b32.xlu0 %v130, 88
    %v431 = vpop.permute.xlu0 %430
    %v432 = vsel %vm172, %v429, 0
    %v434 = vsel %vm172, %v431, 0
    %436 = vmatprep.subr.mxu0 0.0
    %437 = vmatpush1.xpose.msra.mxu0 0.0
    %438 = vmatprep.subr.mxu0 0.0
    %439 = vmatpush1.xpose.msra.mxu0 0.0
    %440 = vmatprep.subr.mxu0 0.0
    %441 = vmatpush1.xpose.msra.mxu0 0.0
    %442 = vmatprep.subr.mxu0 0.0
    %443 = vmatpush1.xpose.msra.mxu0 0.0
    %444 = vmatprep.subr.mxu0 0.0
    %445 = vmatpush1.xpose.msra.mxu0 0.0
    %446 = vmatprep.subr.mxu0 0.0
    %447 = vmatpush1.xpose.msra.mxu0 0.0
    %448 = vmatprep.subr.mxu0 0.0
    %449 = vmatpush1.xpose.msra.mxu0 0.0
    %450 = vmatprep.subr.mxu0 0.0
    %451 = vmatpush1.xpose.msra.mxu0 0.0
    %452 = vmatprep.subr.mxu0 0.0
    %453 = vmatpush1.xpose.msra.mxu0 0.0
    %454 = vmatprep.subr.mxu0 0.0
    %455 = vmatpush1.xpose.msra.mxu0 0.0
    %456 = vmatprep.subr.mxu0 0.0
    %457 = vmatpush1.xpose.msra.mxu0 0.0
    %458 = vmatprep.subr.mxu0 0.0
    %459 = vmatpush1.xpose.msra.mxu0 0.0
    %460 = vmatprep.subr.mxu0 0.0
    %461 = vmatpush1.xpose.msra.mxu0 0.0
    %462 = vmatprep.subr.mxu0 0.0
    %463 = vmatpush1.xpose.msra.mxu0 0.0
    %464 = vmatprep.subr.mxu0 0.0
    %465 = vmatpush1.xpose.msra.mxu0 0.0
    %466 = vmatprep.subr.mxu0 0.0
    %467 = vmatpush1.xpose.msra.mxu0 %v434
    %468 = vmatprep.subr.mxu0 0.0
    %469 = vmatpush2.xpose.msra.mxu0 0.0
    %470 = vmatprep.subr.mxu0 0.0
    %471 = vmatpush2.xpose.msra.mxu0 0.0
    %472 = vmatprep.subr.mxu0 0.0
    %473 = vmatpush2.xpose.msra.mxu0 0.0
    %474 = vmatprep.subr.mxu0 0.0
    %475 = vmatpush2.xpose.msra.mxu0 0.0
    %476 = vmatprep.subr.mxu0 0.0
    %477 = vmatpush2.xpose.msra.mxu0 0.0
    %478 = vmatprep.subr.mxu0 0.0
    %479 = vmatpush2.xpose.msra.mxu0 0.0
    %480 = vmatprep.subr.mxu0 0.0
    %481 = vmatpush2.xpose.msra.mxu0 0.0
    %482 = vmatprep.subr.mxu0 0.0
    %483 = vmatpush2.xpose.msra.mxu0 0.0
    %484 = vmatprep.subr.mxu0 0.0
    %485 = vmatpush2.xpose.msra.mxu0 0.0
    %486 = vmatprep.subr.mxu0 0.0
    %487 = vmatpush2.xpose.msra.mxu0 0.0
    %488 = vmatprep.subr.mxu0 0.0
    %489 = vmatpush2.xpose.msra.mxu0 0.0
    %490 = vmatprep.subr.mxu0 0.0
    %491 = vmatpush2.xpose.msra.mxu0 0.0
    %492 = vmatprep.subr.mxu0 0.0
    %493 = vmatpush2.xpose.msra.mxu0 0.0
    %494 = vmatprep.subr.mxu0 0.0
    %495 = vmatpush2.xpose.msra.mxu0 0.0
    %496 = vmatprep.subr.mxu0 0.0
    %497 = vmatpush2.xpose.msra.mxu0 0.0
    %498 = vmatprep.subr.mxu0 0.0
    %499 = vmatpush2.xpose.msra.mxu0 0.0
    %500 = vmatprep.mubr.f32.mxu0 0.0
    %501 = vmatmul.mubr.f32.gmra.mxu0 %v432
    %v502 = vpop.f32.mrf.mxu0
    %v503 = vadd.f32 %v166, %v502
    %v504 = vpop.f32.mrf.mxu0
    %505 = vdwg.mxu0
    %v506 = vsel %vm172, %v425, -inf
    %507 = vmax.xlane.f32.xlu0 %v506
    %v508 = vpop.xlane.xlu0 %507
    %v509 = vsel %vm172, %v503, -inf
    %510 = vmax.xlane.f32.xlu0 %v509
    %v511 = vpop.xlane.xlu0 %510
    %v512 = vsub.f32 %v425, %v508
    %v513 = vsub.f32 %v503, %v511
    %v514 = vmul.f32 %v512, 1.442695
    %v515 = vpow.pop %v514
    %v516 = vmul.f32 %v513, 1.442695
    %v517 = vpow.pop %v516
    %v518 = vsel %vm172, %v515, 0.0
    %519 = vadd.xlane.f32.xlu0 %v518
    %v520 = vpop.xlane.xlu0 %519
    %v521 = vsel %vm172, %v517, 0.0
    %522 = vadd.xlane.f32.xlu0 %v521
    %v523 = vpop.xlane.xlu0 %522
    %v524 = vrcp.pop %v520
    %v525 = vrcp.pop %v523
    %v526 = vmul.f32 %v515, %v524
    %v527 = vmul.f32 %v517, %v525
    %s528 = scalar_lea.vmem %s10, 16
    %529 = vst.msk [vmem:[%s528] sm:$0xff] %vm172, %v526
    %530 = vst.msk [vmem:[%s528 + $0x8] sm:$0xff] %vm172, %v527
    %531 = vrot.lane.b32.xlu0 %v133, 112
    %v532 = vpop.permute.xlu0 %531
    %533 = vrot.lane.b32.xlu0 %v125, 80
    %v534 = vpop.permute.xlu0 %533
    %v535 = vsel %vm172, %v532, 0
    %v537 = vsel %vm172, %v534, 0
    %539 = vmatprep.subr.mxu0 0.0
    %540 = vmatpush1.xpose.msra.mxu0 0.0
    %541 = vmatprep.subr.mxu0 0.0
    %542 = vmatpush1.xpose.msra.mxu0 0.0
    %543 = vmatprep.subr.mxu0 0.0
    %544 = vmatpush1.xpose.msra.mxu0 0.0
    %545 = vmatprep.subr.mxu0 0.0
    %546 = vmatpush1.xpose.msra.mxu0 0.0
    %547 = vmatprep.subr.mxu0 0.0
    %548 = vmatpush1.xpose.msra.mxu0 0.0
    %549 = vmatprep.subr.mxu0 0.0
    %550 = vmatpush1.xpose.msra.mxu0 0.0
    %551 = vmatprep.subr.mxu0 0.0
    %552 = vmatpush1.xpose.msra.mxu0 0.0
    %553 = vmatprep.subr.mxu0 0.0
    %554 = vmatpush1.xpose.msra.mxu0 0.0
    %555 = vmatprep.subr.mxu0 0.0
    %556 = vmatpush1.xpose.msra.mxu0 0.0
    %557 = vmatprep.subr.mxu0 0.0
    %558 = vmatpush1.xpose.msra.mxu0 0.0
    %559 = vmatprep.subr.mxu0 0.0
    %560 = vmatpush1.xpose.msra.mxu0 0.0
    %561 = vmatprep.subr.mxu0 0.0
    %562 = vmatpush1.xpose.msra.mxu0 0.0
    %563 = vmatprep.subr.mxu0 0.0
    %564 = vmatpush1.xpose.msra.mxu0 0.0
    %565 = vmatprep.subr.mxu0 0.0
    %566 = vmatpush1.xpose.msra.mxu0 0.0
    %567 = vmatprep.subr.mxu0 0.0
    %568 = vmatpush1.xpose.msra.mxu0 0.0
    %569 = vmatprep.subr.mxu0 0.0
    %570 = vmatpush1.xpose.msra.mxu0 %v537
    %571 = vmatprep.subr.mxu0 0.0
    %572 = vmatpush2.xpose.msra.mxu0 0.0
    %573 = vmatprep.subr.mxu0 0.0
    %574 = vmatpush2.xpose.msra.mxu0 0.0
    %575 = vmatprep.subr.mxu0 0.0
    %576 = vmatpush2.xpose.msra.mxu0 0.0
    %577 = vmatprep.subr.mxu0 0.0
    %578 = vmatpush2.xpose.msra.mxu0 0.0
    %579 = vmatprep.subr.mxu0 0.0
    %580 = vmatpush2.xpose.msra.mxu0 0.0
    %581 = vmatprep.subr.mxu0 0.0
    %582 = vmatpush2.xpose.msra.mxu0 0.0
    %583 = vmatprep.subr.mxu0 0.0
    %584 = vmatpush2.xpose.msra.mxu0 0.0
    %585 = vmatprep.subr.mxu0 0.0
    %586 = vmatpush2.xpose.msra.mxu0 0.0
    %587 = vmatprep.subr.mxu0 0.0
    %588 = vmatpush2.xpose.msra.mxu0 0.0
    %589 = vmatprep.subr.mxu0 0.0
    %590 = vmatpush2.xpose.msra.mxu0 0.0
    %591 = vmatprep.subr.mxu0 0.0
    %592 = vmatpush2.xpose.msra.mxu0 0.0
    %593 = vmatprep.subr.mxu0 0.0
    %594 = vmatpush2.xpose.msra.mxu0 0.0
    %595 = vmatprep.subr.mxu0 0.0
    %596 = vmatpush2.xpose.msra.mxu0 0.0
    %597 = vmatprep.subr.mxu0 0.0
    %598 = vmatpush2.xpose.msra.mxu0 0.0
    %599 = vmatprep.subr.mxu0 0.0
    %600 = vmatpush2.xpose.msra.mxu0 0.0
    %601 = vmatprep.subr.mxu0 0.0
    %602 = vmatpush2.xpose.msra.mxu0 0.0
    %603 = vmatprep.mubr.f32.mxu0 0.0
    %604 = vmatmul.mubr.f32.gmra.mxu0 %v535
    %v605 = vpop.f32.mrf.mxu0
    %v606 = vadd.f32 %v162, %v605
    %v607 = vpop.f32.mrf.mxu0
    %608 = vdwg.mxu0
    %609 = vrot.lane.b32.xlu0 %v134, 112
    %v610 = vpop.permute.xlu0 %609
    %611 = vrot.lane.b32.xlu0 %v130, 80
    %v612 = vpop.permute.xlu0 %611
    %v613 = vsel %vm172, %v610, 0
    %v615 = vsel %vm172, %v612, 0
    %617 = vmatprep.subr.mxu0 0.0
    %618 = vmatpush1.xpose.msra.mxu0 0.0
    %619 = vmatprep.subr.mxu0 0.0
    %620 = vmatpush1.xpose.msra.mxu0 0.0
    %621 = vmatprep.subr.mxu0 0.0
    %622 = vmatpush1.xpose.msra.mxu0 0.0
    %623 = vmatprep.subr.mxu0 0.0
    %624 = vmatpush1.xpose.msra.mxu0 0.0
    %625 = vmatprep.subr.mxu0 0.0
    %626 = vmatpush1.xpose.msra.mxu0 0.0
    %627 = vmatprep.subr.mxu0 0.0
    %628 = vmatpush1.xpose.msra.mxu0 0.0
    %629 = vmatprep.subr.mxu0 0.0
    %630 = vmatpush1.xpose.msra.mxu0 0.0
    %631 = vmatprep.subr.mxu0 0.0
    %632 = vmatpush1.xpose.msra.mxu0 0.0
    %633 = vmatprep.subr.mxu0 0.0
    %634 = vmatpush1.xpose.msra.mxu0 0.0
    %635 = vmatprep.subr.mxu0 0.0
    %636 = vmatpush1.xpose.msra.mxu0 0.0
    %637 = vmatprep.subr.mxu0 0.0
    %638 = vmatpush1.xpose.msra.mxu0 0.0
    %639 = vmatprep.subr.mxu0 0.0
    %640 = vmatpush1.xpose.msra.mxu0 0.0
    %641 = vmatprep.subr.mxu0 0.0
    %642 = vmatpush1.xpose.msra.mxu0 0.0
    %643 = vmatprep.subr.mxu0 0.0
    %644 = vmatpush1.xpose.msra.mxu0 0.0
    %645 = vmatprep.subr.mxu0 0.0
    %646 = vmatpush1.xpose.msra.mxu0 0.0
    %647 = vmatprep.subr.mxu0 0.0
    %648 = vmatpush1.xpose.msra.mxu0 %v615
    %649 = vmatprep.subr.mxu0 0.0
    %650 = vmatpush2.xpose.msra.mxu0 0.0
    %651 = vmatprep.subr.mxu0 0.0
    %652 = vmatpush2.xpose.msra.mxu0 0.0
    %653 = vmatprep.subr.mxu0 0.0
    %654 = vmatpush2.xpose.msra.mxu0 0.0
    %655 = vmatprep.subr.mxu0 0.0
    %656 = vmatpush2.xpose.msra.mxu0 0.0
    %657 = vmatprep.subr.mxu0 0.0
    %658 = vmatpush2.xpose.msra.mxu0 0.0
    %659 = vmatprep.subr.mxu0 0.0
    %660 = vmatpush2.xpose.msra.mxu0 0.0
    %661 = vmatprep.subr.mxu0 0.0
    %662 = vmatpush2.xpose.msra.mxu0 0.0
    %663 = vmatprep.subr.mxu0 0.0
    %664 = vmatpush2.xpose.msra.mxu0 0.0
    %665 = vmatprep.subr.mxu0 0.0
    %666 = vmatpush2.xpose.msra.mxu0 0.0
    %667 = vmatprep.subr.mxu0 0.0
    %668 = vmatpush2.xpose.msra.mxu0 0.0
    %669 = vmatprep.subr.mxu0 0.0
    %670 = vmatpush2.xpose.msra.mxu0 0.0
    %671 = vmatprep.subr.mxu0 0.0
    %672 = vmatpush2.xpose.msra.mxu0 0.0
    %673 = vmatprep.subr.mxu0 0.0
    %674 = vmatpush2.xpose.msra.mxu0 0.0
    %675 = vmatprep.subr.mxu0 0.0
    %676 = vmatpush2.xpose.msra.mxu0 0.0
    %677 = vmatprep.subr.mxu0 0.0
    %678 = vmatpush2.xpose.msra.mxu0 0.0
    %679 = vmatprep.subr.mxu0 0.0
    %680 = vmatpush2.xpose.msra.mxu0 0.0
    %681 = vmatprep.mubr.f32.mxu0 0.0
    %682 = vmatmul.mubr.f32.gmra.mxu0 %v613
    %v683 = vpop.f32.mrf.mxu0
    %v684 = vadd.f32 %v166, %v683
    %v685 = vpop.f32.mrf.mxu0
    %686 = vdwg.mxu0
    %v687 = vsel %vm172, %v606, -inf
    %688 = vmax.xlane.f32.xlu0 %v687
    %v689 = vpop.xlane.xlu0 %688
    %v690 = vsel %vm172, %v684, -inf
    %691 = vmax.xlane.f32.xlu0 %v690
    %v692 = vpop.xlane.xlu0 %691
    %v693 = vsub.f32 %v606, %v689
    %v694 = vsub.f32 %v684, %v692
    %v695 = vmul.f32 %v693, 1.442695
    %v696 = vpow.pop %v695
    %v697 = vmul.f32 %v694, 1.442695
    %v698 = vpow.pop %v697
    %v699 = vsel %vm172, %v696, 0.0
    %700 = vadd.xlane.f32.xlu0 %v699
    %v701 = vpop.xlane.xlu0 %700
    %v702 = vsel %vm172, %v698, 0.0
    %703 = vadd.xlane.f32.xlu0 %v702
    %v704 = vpop.xlane.xlu0 %703
    %v705 = vrcp.pop %v701
    %v706 = vrcp.pop %v704
    %v707 = vmul.f32 %v696, %v705
    %v708 = vmul.f32 %v698, %v706
    %s709 = scalar_lea.vmem %s10, 32
    %710 = vst.msk [vmem:[%s709] sm:$0xff] %vm172, %v707
    %711 = vst.msk [vmem:[%s709 + $0x8] sm:$0xff] %vm172, %v708
    %712 = vrot.lane.b32.xlu0 %v133, 104
    %v713 = vpop.permute.xlu0 %712
    %714 = vrot.lane.b32.xlu0 %v125, 72
    %v715 = vpop.permute.xlu0 %714
    %v716 = vsel %vm172, %v713, 0
    %v718 = vsel %vm172, %v715, 0
    %720 = vmatprep.subr.mxu0 0.0
    %721 = vmatpush1.xpose.msra.mxu0 0.0
    %722 = vmatprep.subr.mxu0 0.0
    %723 = vmatpush1.xpose.msra.mxu0 0.0
    %724 = vmatprep.subr.mxu0 0.0
    %725 = vmatpush1.xpose.msra.mxu0 0.0
    %726 = vmatprep.subr.mxu0 0.0
    %727 = vmatpush1.xpose.msra.mxu0 0.0
    %728 = vmatprep.subr.mxu0 0.0
    %729 = vmatpush1.xpose.msra.mxu0 0.0
    %730 = vmatprep.subr.mxu0 0.0
    %731 = vmatpush1.xpose.msra.mxu0 0.0
    %732 = vmatprep.subr.mxu0 0.0
    %733 = vmatpush1.xpose.msra.mxu0 0.0
    %734 = vmatprep.subr.mxu0 0.0
    %735 = vmatpush1.xpose.msra.mxu0 0.0
    %736 = vmatprep.subr.mxu0 0.0
    %737 = vmatpush1.xpose.msra.mxu0 0.0
    %738 = vmatprep.subr.mxu0 0.0
    %739 = vmatpush1.xpose.msra.mxu0 0.0
    %740 = vmatprep.subr.mxu0 0.0
    %741 = vmatpush1.xpose.msra.mxu0 0.0
    %742 = vmatprep.subr.mxu0 0.0
    %743 = vmatpush1.xpose.msra.mxu0 0.0
    %744 = vmatprep.subr.mxu0 0.0
    %745 = vmatpush1.xpose.msra.mxu0 0.0
    %746 = vmatprep.subr.mxu0 0.0
    %747 = vmatpush1.xpose.msra.mxu0 0.0
    %748 = vmatprep.subr.mxu0 0.0
    %749 = vmatpush1.xpose.msra.mxu0 0.0
    %750 = vmatprep.subr.mxu0 0.0
    %751 = vmatpush1.xpose.msra.mxu0 %v718
    %752 = vmatprep.subr.mxu0 0.0
    %753 = vmatpush2.xpose.msra.mxu0 0.0
    %754 = vmatprep.subr.mxu0 0.0
    %755 = vmatpush2.xpose.msra.mxu0 0.0
    %756 = vmatprep.subr.mxu0 0.0
    %757 = vmatpush2.xpose.msra.mxu0 0.0
    %758 = vmatprep.subr.mxu0 0.0
    %759 = vmatpush2.xpose.msra.mxu0 0.0
    %760 = vmatprep.subr.mxu0 0.0
    %761 = vmatpush2.xpose.msra.mxu0 0.0
    %762 = vmatprep.subr.mxu0 0.0
    %763 = vmatpush2.xpose.msra.mxu0 0.0
    %764 = vmatprep.subr.mxu0 0.0
    %765 = vmatpush2.xpose.msra.mxu0 0.0
    %766 = vmatprep.subr.mxu0 0.0
    %767 = vmatpush2.xpose.msra.mxu0 0.0
    %768 = vmatprep.subr.mxu0 0.0
    %769 = vmatpush2.xpose.msra.mxu0 0.0
    %770 = vmatprep.subr.mxu0 0.0
    %771 = vmatpush2.xpose.msra.mxu0 0.0
    %772 = vmatprep.subr.mxu0 0.0
    %773 = vmatpush2.xpose.msra.mxu0 0.0
    %774 = vmatprep.subr.mxu0 0.0
    %775 = vmatpush2.xpose.msra.mxu0 0.0
    %776 = vmatprep.subr.mxu0 0.0
    %777 = vmatpush2.xpose.msra.mxu0 0.0
    %778 = vmatprep.subr.mxu0 0.0
    %779 = vmatpush2.xpose.msra.mxu0 0.0
    %780 = vmatprep.subr.mxu0 0.0
    %781 = vmatpush2.xpose.msra.mxu0 0.0
    %782 = vmatprep.subr.mxu0 0.0
    %783 = vmatpush2.xpose.msra.mxu0 0.0
    %784 = vmatprep.mubr.f32.mxu0 0.0
    %785 = vmatmul.mubr.f32.gmra.mxu0 %v716
    %v786 = vpop.f32.mrf.mxu0
    %v787 = vadd.f32 %v162, %v786
    %v788 = vpop.f32.mrf.mxu0
    %789 = vdwg.mxu0
    %790 = vrot.lane.b32.xlu0 %v134, 104
    %v791 = vpop.permute.xlu0 %790
    %792 = vrot.lane.b32.xlu0 %v130, 72
    %v793 = vpop.permute.xlu0 %792
    %v794 = vsel %vm172, %v791, 0
    %v796 = vsel %vm172, %v793, 0
    %798 = vmatprep.subr.mxu0 0.0
    %799 = vmatpush1.xpose.msra.mxu0 0.0
    %800 = vmatprep.subr.mxu0 0.0
    %801 = vmatpush1.xpose.msra.mxu0 0.0
    %802 = vmatprep.subr.mxu0 0.0
    %803 = vmatpush1.xpose.msra.mxu0 0.0
    %804 = vmatprep.subr.mxu0 0.0
    %805 = vmatpush1.xpose.msra.mxu0 0.0
    %806 = vmatprep.subr.mxu0 0.0
    %807 = vmatpush1.xpose.msra.mxu0 0.0
    %808 = vmatprep.subr.mxu0 0.0
    %809 = vmatpush1.xpose.msra.mxu0 0.0
    %810 = vmatprep.subr.mxu0 0.0
    %811 = vmatpush1.xpose.msra.mxu0 0.0
    %812 = vmatprep.subr.mxu0 0.0
    %813 = vmatpush1.xpose.msra.mxu0 0.0
    %814 = vmatprep.subr.mxu0 0.0
    %815 = vmatpush1.xpose.msra.mxu0 0.0
    %816 = vmatprep.subr.mxu0 0.0
    %817 = vmatpush1.xpose.msra.mxu0 0.0
    %818 = vmatprep.subr.mxu0 0.0
    %819 = vmatpush1.xpose.msra.mxu0 0.0
    %820 = vmatprep.subr.mxu0 0.0
    %821 = vmatpush1.xpose.msra.mxu0 0.0
    %822 = vmatprep.subr.mxu0 0.0
    %823 = vmatpush1.xpose.msra.mxu0 0.0
    %824 = vmatprep.subr.mxu0 0.0
    %825 = vmatpush1.xpose.msra.mxu0 0.0
    %826 = vmatprep.subr.mxu0 0.0
    %827 = vmatpush1.xpose.msra.mxu0 0.0
    %828 = vmatprep.subr.mxu0 0.0
    %829 = vmatpush1.xpose.msra.mxu0 %v796
    %830 = vmatprep.subr.mxu0 0.0
    %831 = vmatpush2.xpose.msra.mxu0 0.0
    %832 = vmatprep.subr.mxu0 0.0
    %833 = vmatpush2.xpose.msra.mxu0 0.0
    %834 = vmatprep.subr.mxu0 0.0
    %835 = vmatpush2.xpose.msra.mxu0 0.0
    %836 = vmatprep.subr.mxu0 0.0
    %837 = vmatpush2.xpose.msra.mxu0 0.0
    %838 = vmatprep.subr.mxu0 0.0
    %839 = vmatpush2.xpose.msra.mxu0 0.0
    %840 = vmatprep.subr.mxu0 0.0
    %841 = vmatpush2.xpose.msra.mxu0 0.0
    %842 = vmatprep.subr.mxu0 0.0
    %843 = vmatpush2.xpose.msra.mxu0 0.0
    %844 = vmatprep.subr.mxu0 0.0
    %845 = vmatpush2.xpose.msra.mxu0 0.0
    %846 = vmatprep.subr.mxu0 0.0
    %847 = vmatpush2.xpose.msra.mxu0 0.0
    %848 = vmatprep.subr.mxu0 0.0
    %849 = vmatpush2.xpose.msra.mxu0 0.0
    %850 = vmatprep.subr.mxu0 0.0
    %851 = vmatpush2.xpose.msra.mxu0 0.0
    %852 = vmatprep.subr.mxu0 0.0
    %853 = vmatpush2.xpose.msra.mxu0 0.0
    %854 = vmatprep.subr.mxu0 0.0
    %855 = vmatpush2.xpose.msra.mxu0 0.0
    %856 = vmatprep.subr.mxu0 0.0
    %857 = vmatpush2.xpose.msra.mxu0 0.0
    %858 = vmatprep.subr.mxu0 0.0
    %859 = vmatpush2.xpose.msra.mxu0 0.0
    %860 = vmatprep.subr.mxu0 0.0
    %861 = vmatpush2.xpose.msra.mxu0 0.0
    %862 = vmatprep.mubr.f32.mxu0 0.0
    %863 = vmatmul.mubr.f32.gmra.mxu0 %v794
    %v864 = vpop.f32.mrf.mxu0
    %v865 = vadd.f32 %v166, %v864
    %v866 = vpop.f32.mrf.mxu0
    %867 = vdwg.mxu0
    %v868 = vsel %vm172, %v787, -inf
    %869 = vmax.xlane.f32.xlu0 %v868
    %v870 = vpop.xlane.xlu0 %869
    %v871 = vsel %vm172, %v865, -inf
    %872 = vmax.xlane.f32.xlu0 %v871
    %v873 = vpop.xlane.xlu0 %872
    %v874 = vsub.f32 %v787, %v870
    %v875 = vsub.f32 %v865, %v873
    %v876 = vmul.f32 %v874, 1.442695
    %v877 = vpow.pop %v876
    %v878 = vmul.f32 %v875, 1.442695
    %v879 = vpow.pop %v878
    %v880 = vsel %vm172, %v877, 0.0
    %881 = vadd.xlane.f32.xlu0 %v880
    %v882 = vpop.xlane.xlu0 %881
    %v883 = vsel %vm172, %v879, 0.0
    %884 = vadd.xlane.f32.xlu0 %v883
    %v885 = vpop.xlane.xlu0 %884
    %v886 = vrcp.pop %v882
    %v887 = vrcp.pop %v885
    %v888 = vmul.f32 %v877, %v886
    %v889 = vmul.f32 %v879, %v887
    %s890 = scalar_lea.vmem %s10, 48
    %891 = vst.msk [vmem:[%s890] sm:$0xff] %vm172, %v888
    %892 = vst.msk [vmem:[%s890 + $0x8] sm:$0xff] %vm172, %v889
    %v893 = vld [vmem:[%s4] sm:$0xff]
    %v894 = vld [vmem:[%s4 + $0x8] sm:$0xff]
    %v895 = vld [vmem:[%s4 + $0x10] sm:$0xff]
    %v896 = vld [vmem:[%s4 + $0x18] sm:$0xff]
    %v897 = vld [vmem:[%s5] sm:$0x1]
    %v899 = vlaneseq
    %v900 = vshrl.u32 %v899, 7
    %v901 = vsub.s32 0, %v900
    %v902 = vrot.slane %v897, %v901
    %904 = vmatprep.subr.mxu0 0.0
    %905 = vmatpush1.msra.mxu0 0.0
    %906 = vmatprep.subr.mxu0 0.0
    %907 = vmatpush1.msra.mxu0 0.0
    %908 = vmatprep.subr.mxu0 0.0
    %909 = vmatpush1.msra.mxu0 0.0
    %910 = vmatprep.subr.mxu0 0.0
    %911 = vmatpush1.msra.mxu0 0.0
    %912 = vmatprep.subr.mxu0 0.0
    %913 = vmatpush1.msra.mxu0 0.0
    %914 = vmatprep.subr.mxu0 0.0
    %915 = vmatpush1.msra.mxu0 0.0
    %916 = vmatprep.subr.mxu0 0.0
    %917 = vmatpush1.msra.mxu0 0.0
    %918 = vmatprep.subr.mxu0 0.0
    %919 = vmatpush1.msra.mxu0 0.0
    %920 = vmatprep.subr.mxu0 0.0
    %921 = vmatpush1.msra.mxu0 0.0
    %922 = vmatprep.subr.mxu0 0.0
    %923 = vmatpush1.msra.mxu0 0.0
    %924 = vmatprep.subr.mxu0 0.0
    %925 = vmatpush1.msra.mxu0 0.0
    %926 = vmatprep.subr.mxu0 0.0
    %927 = vmatpush1.msra.mxu0 0.0
    %928 = vmatprep.subr.mxu0 0.0
    %929 = vmatpush1.msra.mxu0 %v896
    %930 = vmatprep.subr.mxu0 0.0
    %931 = vmatpush1.msra.mxu0 %v895
    %932 = vmatprep.subr.mxu0 0.0
    %933 = vmatpush1.msra.mxu0 %v894
    %934 = vmatprep.subr.mxu0 0.0
    %935 = vmatpush1.msra.mxu0 %v893
    %936 = vmatprep.subr.mxu0 0.0
    %937 = vmatpush2.msra.mxu0 0.0
    %938 = vmatprep.subr.mxu0 0.0
    %939 = vmatpush2.msra.mxu0 0.0
    %940 = vmatprep.subr.mxu0 0.0
    %941 = vmatpush2.msra.mxu0 0.0
    %942 = vmatprep.subr.mxu0 0.0
    %943 = vmatpush2.msra.mxu0 0.0
    %944 = vmatprep.subr.mxu0 0.0
    %945 = vmatpush2.msra.mxu0 0.0
    %946 = vmatprep.subr.mxu0 0.0
    %947 = vmatpush2.msra.mxu0 0.0
    %948 = vmatprep.subr.mxu0 0.0
    %949 = vmatpush2.msra.mxu0 0.0
    %950 = vmatprep.subr.mxu0 0.0
    %951 = vmatpush2.msra.mxu0 0.0
    %952 = vmatprep.subr.mxu0 0.0
    %953 = vmatpush2.msra.mxu0 0.0
    %954 = vmatprep.subr.mxu0 0.0
    %955 = vmatpush2.msra.mxu0 0.0
    %956 = vmatprep.subr.mxu0 0.0
    %957 = vmatpush2.msra.mxu0 0.0
    %958 = vmatprep.subr.mxu0 0.0
    %959 = vmatpush2.msra.mxu0 0.0
    %960 = vmatprep.subr.mxu0 0.0
    %961 = vmatpush2.msra.mxu0 0.0
    %962 = vmatprep.subr.mxu0 0.0
    %963 = vmatpush2.msra.mxu0 0.0
    %964 = vmatprep.subr.mxu0 0.0
    %965 = vmatpush2.msra.mxu0 0.0
    %966 = vmatprep.subr.mxu0 0.0
    %967 = vmatpush2.msra.mxu0 0.0
    %968 = vmatprep.mubr.f32.mxu0 0.0
    %969 = vmatmul.mubr.f32.gmra.mxu0 %v53
    %v970 = vpop.f32.mrf.mxu0
    %v971 = vadd.f32 %v902, %v970
    %v972 = vpop.f32.mrf.mxu0
    %973 = vmatprep.mubr.f32.mxu0 0.0
    %974 = vmatmul.mubr.f32.gmra.mxu0 %v56
    %v975 = vpop.f32.mrf.mxu0
    %v976 = vadd.f32 %v902, %v975
    %v977 = vpop.f32.mrf.mxu0
    %978 = vdwg.mxu0
    %v979 = vmax.f32 %v971, 0.0
    %v980 = vmax.f32 %v976, 0.0
    %v981 = vld [vmem:[%s6] sm:$0xff]
    %v982 = vld [vmem:[%s6 + $0x8] sm:$0xff]
    %v983 = vld [vmem:[%s6 + $0x10] sm:$0xff]
    %v984 = vld [vmem:[%s6 + $0x18] sm:$0xff]
    %v985 = vld [vmem:[%s6 + $0x20] sm:$0xff]
    %v986 = vld [vmem:[%s6 + $0x28] sm:$0xff]
    %v987 = vld [vmem:[%s6 + $0x30] sm:$0xff]
    %v988 = vld [vmem:[%s6 + $0x38] sm:$0xff]
    %v989 = vld [vmem:[%s7] sm:$0x1]
    %v991 = vlaneseq
    %v992 = vshrl.u32 %v991, 7
    %v993 = vsub.s32 0, %v992
    %v994 = vrot.slane %v989, %v993
    %vm996 = vcmask 523264
    %v998 = vsel %vm996, %v979, 0
    %v1001 = vsel %vm996, %v980, 0
    %1003 = vmatprep.subr.mxu0 0.0
    %1004 = vmatpush1.msra.mxu0 0.0
    %1005 = vmatprep.subr.mxu0 0.0
    %1006 = vmatpush1.msra.mxu0 0.0
    %1007 = vmatprep.subr.mxu0 0.0
    %1008 = vmatpush1.msra.mxu0 0.0
    %1009 = vmatprep.subr.mxu0 0.0
    %1010 = vmatpush1.msra.mxu0 0.0
    %1011 = vmatprep.subr.mxu0 0.0
    %1012 = vmatpush1.msra.mxu0 0.0
    %1013 = vmatprep.subr.mxu0 0.0
    %1014 = vmatpush1.msra.mxu0 0.0
    %1015 = vmatprep.subr.mxu0 0.0
    %1016 = vmatpush1.msra.mxu0 0.0
    %1017 = vmatprep.subr.mxu0 0.0
    %1018 = vmatpush1.msra.mxu0 0.0
    %1019 = vmatprep.subr.mxu0 0.0
    %1020 = vmatpush1.msra.mxu0 %v988
    %1021 = vmatprep.subr.mxu0 0.0
    %1022 = vmatpush1.msra.mxu0 %v987
    %1023 = vmatprep.subr.mxu0 0.0
    %1024 = vmatpush1.msra.mxu0 %v986
    %1025 = vmatprep.subr.mxu0 0.0
    %1026 = vmatpush1.msra.mxu0 %v985
    %1027 = vmatprep.subr.mxu0 0.0
    %1028 = vmatpush1.msra.mxu0 %v984
    %1029 = vmatprep.subr.mxu0 0.0
    %1030 = vmatpush1.msra.mxu0 %v983
    %1031 = vmatprep.subr.mxu0 0.0
    %1032 = vmatpush1.msra.mxu0 %v982
    %1033 = vmatprep.subr.mxu0 0.0
    %1034 = vmatpush1.msra.mxu0 %v981
    %1035 = vmatprep.subr.mxu0 0.0
    %1036 = vmatpush2.msra.mxu0 0.0
    %1037 = vmatprep.subr.mxu0 0.0
    %1038 = vmatpush2.msra.mxu0 0.0
    %1039 = vmatprep.subr.mxu0 0.0
    %1040 = vmatpush2.msra.mxu0 0.0
    %1041 = vmatprep.subr.mxu0 0.0
    %1042 = vmatpush2.msra.mxu0 0.0
    %1043 = vmatprep.subr.mxu0 0.0
    %1044 = vmatpush2.msra.mxu0 0.0
    %1045 = vmatprep.subr.mxu0 0.0
    %1046 = vmatpush2.msra.mxu0 0.0
    %1047 = vmatprep.subr.mxu0 0.0
    %1048 = vmatpush2.msra.mxu0 0.0
    %1049 = vmatprep.subr.mxu0 0.0
    %1050 = vmatpush2.msra.mxu0 0.0
    %1051 = vmatprep.subr.mxu0 0.0
    %1052 = vmatpush2.msra.mxu0 0.0
    %1053 = vmatprep.subr.mxu0 0.0
    %1054 = vmatpush2.msra.mxu0 0.0
    %1055 = vmatprep.subr.mxu0 0.0
    %1056 = vmatpush2.msra.mxu0 0.0
    %1057 = vmatprep.subr.mxu0 0.0
    %1058 = vmatpush2.msra.mxu0 0.0
    %1059 = vmatprep.subr.mxu0 0.0
    %1060 = vmatpush2.msra.mxu0 0.0
    %1061 = vmatprep.subr.mxu0 0.0
    %1062 = vmatpush2.msra.mxu0 0.0
    %1063 = vmatprep.subr.mxu0 0.0
    %1064 = vmatpush2.msra.mxu0 0.0
    %1065 = vmatprep.subr.mxu0 0.0
    %1066 = vmatpush2.msra.mxu0 0.0
    %1067 = vmatprep.mubr.f32.mxu0 0.0
    %1068 = vmatmul.mubr.f32.gmra.mxu0 %v998
    %v1069 = vpop.f32.mrf.mxu0
    %v1070 = vadd.f32 %v994, %v1069
    %v1071 = vpop.f32.mrf.mxu0
    %1072 = vmatprep.mubr.f32.mxu0 0.0
    %1073 = vmatmul.mubr.f32.gmra.mxu0 %v1001
    %v1074 = vpop.f32.mrf.mxu0
    %v1075 = vadd.f32 %v994, %v1074
    %v1076 = vpop.f32.mrf.mxu0
    %1077 = vdwg.mxu0
    %v1078 = vadd.f32 %v38, %v1070
    %v1079 = vadd.f32 %v39, %v1075
    %v1080 = vsel %vm51, %v1078, 0.0
    %1081 = vadd.xlane.f32.xlu0 %v1080
    %v1082 = vpop.xlane.xlu0 %1081
    %v1083 = vsel %vm51, %v1079, 0.0
    %1084 = vadd.xlane.f32.xlu0 %v1083
    %v1085 = vpop.xlane.xlu0 %1084
    %v1086 = vrcp.pop 32.0
    %v1087 = vmul.f32 %v1082, %v1086
    %v1088 = vmul.f32 %v1085, %v1086
    %v1089 = vsub.f32 %v1078, %v1087
    %v1090 = vsub.f32 %v1079, %v1088
    %v1091 = vmul.f32 %v1089, %v1089
    %v1092 = vmul.f32 %v1090, %v1090
    %v1093 = vsel %vm51, %v1091, 0.0
    %1094 = vadd.xlane.f32.xlu0 %v1093
    %v1095 = vpop.xlane.xlu0 %1094
    %v1096 = vsel %vm51, %v1092, 0.0
    %1097 = vadd.xlane.f32.xlu0 %v1096
    %v1098 = vpop.xlane.xlu0 %1097
    %v1099 = vmul.f32 %v1095, %v1086
    %v1100 = vmul.f32 %v1098, %v1086
    %v1101 = vadd.f32 %v1099, 1e-05
    %v1102 = vadd.f32 %v1100, 1e-05
    %v1103 = vrsqrt.pop %v1101
    %v1104 = vrsqrt.pop %v1102
    %v1105 = vmul.f32 %v1089, %v1103
    %v1106 = vmul.f32 %v1090, %v1104
    %v1107 = vld [vmem:[%s8] sm:$0x1]
    %v1109 = vlaneseq
    %v1110 = vshrl.u32 %v1109, 7
    %v1111 = vsub.s32 0, %v1110
    %v1112 = vrot.slane %v1107, %v1111
    %v1114 = vmul.f32 %v1105, %v1112
    %v1115 = vmul.f32 %v1106, %v1112
    %v1116 = vld [vmem:[%s9] sm:$0x1]
    %v1118 = vlaneseq
    %v1119 = vshrl.u32 %v1118, 7
    %v1120 = vsub.s32 0, %v1119
    %v1121 = vrot.slane %v1116, %v1120
    %v1123 = vadd.f32 %v1114, %v1121
    %v1124 = vadd.f32 %v1115, %v1121
    %1125 = vst.msk [vmem:[#allocation2] sm:$0xff] %vm51, %v1123
    %1126 = vst.msk [vmem:[#allocation2 + $0x8] sm:$0xff] %vm51, %v1124
    // Predicated region
    $region42: #{encoder_layer.1} parent=1 // pred_check
      _
    $region43: #{encoder_layer.1} parent=1 // pred_check_branch
      %1128 = sbr.rel (0) target = $region45
    $region44: #{encoder_layer.1} parent=1 // pred_region
      _
    $region45: #{encoder_layer.1} parent=1 // pred_fallthru
      _
    // Predicated region
    $region46: #{encoder_layer.1} parent=1 // pred_check
      _
    $region47: #{encoder_layer.1} parent=1 // pred_check_branch
      %1130 = sbr.rel (0) target = $region49
    $region48: #{encoder_layer.1} parent=1 // pred_region
      %s1132 = ssub.s32 256, 256
      %1133 = vsyncadd [#allocation3], %s1132
      %s1134 = sshll.u32 [#allocation2], 4
      %s1135 = int_to_ptr.vmem [resolvable:$true] %s1134
      %1140 = dma.vmem_to_hbm [thread:$0]  %s1135, 256, %s11, [#allocation3], 128, 128, 8
    $region49: #{encoder_layer.1} parent=1 // pred_fallthru
      _
    // Predicated region
    $region50: #{encoder_layer.1} parent=1 // pred_check
      _
    $region51: #{encoder_layer.1} parent=1 // pred_check_branch
      %1142 = sbr.rel (0) target = $region53
    $region52: #{encoder_layer.1} parent=1 // pred_region
      _
    $region53: #{encoder_layer.1} parent=1 // pred_fallthru
      _
    // Predicated region
    $region54: #{encoder_layer.1} parent=1 // pred_check
      _
    $region55: #{encoder_layer.1} parent=1 // pred_check_branch
      %1144 = sbr.rel (0) target = $region57
    $region56: #{encoder_layer.1} parent=1 // pred_region
      %1145 = dma.done [#allocation3], 256
    $region57: #{encoder_layer.1} parent=1 // pred_fallthru
      _
    %1146 = vsyncpa [#allocation3], 1

</llo_original>
